<compile_context>
chip_gen: v5e
topology: v5e:2x2
jax: 0.10.0
libtpu: 0.0.40
codegen_flags: <defaults>
</compile_context>

<pallas_src>
import jax
import jax.numpy as jnp
import numpy as np
from jax import lax
from jax.experimental import pallas as pl
from jax.experimental.pallas import tpu as pltpu

EPS = 1e-5  # nn.BatchNorm1d default eps


# ------------------------------ Pallas kernel ------------------------------ #
def _make_user_block_kernel(*, N, F, H, OF, S, operation):
    """Build the fused User_block kernel (closure over static sizes)."""
    NF = N * F
    S2H = (S + 2) * H          # lanes of stage-1 hidden (S user slices + irs + bs)
    S2O = (S + 2) * OF         # lanes of stage-1 output
    NCY = S2O if operation == "mean" else 3 * OF

    def kernel(x_ref, a_ref, b_ref, o_ref):
        xf = x_ref[...]                                   # (B, N*F)

        # ---- slab A: big block-diagonal W1 + all gamma/beta vectors ----
        w1big = a_ref[0:NF, :]                            # (N*F, (S+2)*H)
        g1    = a_ref[NF + 0:NF + 1, :]                   # (1, (S+2)*H)
        be1   = a_ref[NF + 1:NF + 2, :]
        g2    = a_ref[NF + 2:NF + 3, 0:S2O]               # (1, (S+2)*OF)
        be2   = a_ref[NF + 3:NF + 4, 0:S2O]
        cg1   = a_ref[NF + 4:NF + 5, 0:H]
        cbe1  = a_ref[NF + 5:NF + 6, 0:H]
        cg2   = a_ref[NF + 6:NF + 7, 0:OF]
        cbe2  = a_ref[NF + 7:NF + 8, 0:OF]

        # ---- slab B: remaining weights, row-stacked (static slices = views) --
        r = 0
        w2big = b_ref[r:r + S2H, 0:S2O]; r += S2H         # ((S+2)*H, (S+2)*OF)
        wcy   = b_ref[r:r + NCY, 0:H];   r += NCY         # combine W1, net-output rows
        wcord = b_ref[r:r + NF, 0:H];    r += NF          # combine W1, x[:,order,:] rows
        cw2   = b_ref[r:r + H, 0:OF]                      # (H, OF)

        def bn_sigmoid(h, gamma, beta):
            # BatchNorm1d (training mode, biased batch stats over axis 0) + exact
            # sigmoid.  Lane groups are disjoint per slice/net, so the plain
            # axis-0 mean IS the per-slice batch statistic.
            mean = jnp.mean(h, axis=0, keepdims=True)
            d = h - mean
            var = jnp.mean(d * d, axis=0, keepdims=True)
            z = d * lax.rsqrt(var + EPS) * gamma + beta
            return 1.0 / (1.0 + jnp.exp(-z))

        # ---- stage 1: user slices + irs + bs nets, two wide matmuls ----
        h = jnp.dot(xf, w1big, preferred_element_type=jnp.float32)   # (B, (S+2)*H)
        h = bn_sigmoid(h, g1, be1)
        y = jnp.dot(h, w2big, preferred_element_type=jnp.float32)    # (B, (S+2)*OF)
        y = bn_sigmoid(y, g2, be2)

        # ---- combine net layer 1 (concat-free) ----
        if operation == "mean":
            # mean over slices is folded into wcy (rows = cwa/S tiled S times,
            # then cwi, cwb).
            chp = jnp.dot(y, wcy, preferred_element_type=jnp.float32)
        else:  # "max": aggregate with static lane slices, then partial matmuls
            agg = y[:, 0:OF]
            for s in range(1, S):
                agg = jnp.maximum(agg, y[:, s * OF:(s + 1) * OF])
            rest = y[:, S * OF:S2O]                                   # irs | bs outputs
            chp = (jnp.dot(agg, wcy[0:OF, :], preferred_element_type=jnp.float32)
                   + jnp.dot(rest, wcy[OF:3 * OF, :], preferred_element_type=jnp.float32))
        # raw x[:, order, :] term of the concat, via zero-padded row-block weight
        chp = chp + jnp.dot(xf, wcord, preferred_element_type=jnp.float32)

        ch = bn_sigmoid(chp, cg1, cbe1)
        cy = jnp.dot(ch, cw2, preferred_element_type=jnp.float32)
        o_ref[...] = bn_sigmoid(cy, cg2, cbe2)

    return kernel


# --------------------------- parameter packing ------------------------------ #
def _pad_row(v, width):
    v = jnp.asarray(v, jnp.float32).reshape(1, -1)
    return jnp.pad(v, ((0, 0), (0, width - v.shape[1])))


def _pad_cols(w, width):
    w = jnp.asarray(w, jnp.float32)
    return jnp.pad(w, ((0, 0), (0, width - w.shape[1])))


def pack_user_block_params(all_params, number_nodes, order, operation="mean"):
    """One-time packing of all User_block parameters into two f32 slabs.

    Slab A: (N*F + 8, (S+2)*H)  = block-diagonal stage-1 W1 (node permutation
            folded in) + the 8 gamma/beta vectors as padded rows.
    Slab B: rows = [block-diag stage-1 W2 | combine W1 (net-output rows, mean
            folded in) | combine W1 (x[:,order,:] rows, zero-padded) | combine W2].
    Linear biases are intentionally dropped (cancelled by training-mode BN).
    """
    user_p, irs_p, bs_p, comb_p = all_params
    uw1, _, ug1, ube1, uw2, _, ug2, ube2 = user_p
    iw1, _, ig1, ibe1, iw2, _, ig2, ibe2 = irs_p
    bw1, _, bg1, bbe1, bw2, _, bg2, bbe2 = bs_p
    cw1, _, cg1, cbe1, cw2, _, cg2, cbe2 = comb_p

    N = number_nodes
    S = N - 2
    F, H = uw1.shape
    OF = uw2.shape[1]
    NF = N * F
    S2H = (S + 2) * H
    S2O = (S + 2) * OF

    # Same node selection as the PyTorch loop: node ii if ii < order else ii+1.
    user_nodes = [ii if ii < order else ii + 1 for ii in range(S)]

    # ---- slab A ----
    w1big = jnp.zeros((NF, S2H), jnp.float32)
    for s, node in enumerate(user_nodes):
        w1big = w1big.at[node * F:(node + 1) * F, s * H:(s + 1) * H].set(uw1)
    w1big = w1big.at[(N - 2) * F:(N - 1) * F, S * H:(S + 1) * H].set(iw1)
    w1big = w1big.at[(N - 1) * F:N * F, (S + 1) * H:(S + 2) * H].set(bw1)

    g1big = jnp.concatenate([jnp.tile(ug1.reshape(1, H), (1, S)),
                             ig1.reshape(1, H), bg1.reshape(1, H)], axis=1)
    be1big = jnp.concatenate([jnp.tile(ube1.reshape(1, H), (1, S)),
                              ibe1.reshape(1, H), bbe1.reshape(1, H)], axis=1)
    g2big = jnp.concatenate([jnp.tile(ug2.reshape(1, OF), (1, S)),
                             ig2.reshape(1, OF), bg2.reshape(1, OF)], axis=1)
    be2big = jnp.concatenate([jnp.tile(ube2.reshape(1, OF), (1, S)),
                              ibe2.reshape(1, OF), bbe2.reshape(1, OF)], axis=1)

    vecs = jnp.concatenate([
        _pad_row(g1big, S2H), _pad_row(be1big, S2H),
        _pad_row(g2big, S2H), _pad_row(be2big, S2H),
        _pad_row(cg1, S2H), _pad_row(cbe1, S2H),
        _pad_row(cg2, S2H), _pad_row(cbe2, S2H)], axis=0)       # (8, S2H)

    slab_a = jnp.concatenate([w1big, vecs], axis=0)             # (NF+8, S2H)

    # ---- slab B ----
    w2big = jnp.zeros((S2H, S2O), jnp.float32)
    for s in range(S):
        w2big = w2big.at[s * H:(s + 1) * H, s * OF:(s + 1) * OF].set(uw2)
    w2big = w2big.at[S * H:(S + 1) * H, S * OF:(S + 1) * OF].set(iw2)
    w2big = w2big.at[(S + 1) * H:(S + 2) * H, (S + 1) * OF:(S + 2) * OF].set(bw2)

    cwa, cwi, cwb, cwo = (cw1[0:OF], cw1[OF:2 * OF], cw1[2 * OF:3 * OF], cw1[3 * OF:])
    if operation == "mean":
        wcy = jnp.concatenate([jnp.tile(cwa / S, (S, 1)), cwi, cwb], axis=0)   # (S2O, H)
    else:
        wcy = jnp.concatenate([cwa, cwi, cwb], axis=0)                          # (3*OF, H)
    wcord = jnp.zeros((NF, H), jnp.float32).at[order * F:(order + 1) * F, :].set(cwo)

    WB = max(S2O, H)
    slab_b = jnp.concatenate([_pad_cols(w2big, WB), _pad_cols(wcy, WB),
                              _pad_cols(wcord, WB), _pad_cols(cw2, WB)], axis=0)

    return slab_a.astype(jnp.float32), slab_b.astype(jnp.float32)


# ------------------------------- wrapper ----------------------------------- #
def user_block_forward(x, slab_a, slab_b, *, hidden, output_shape, operation="mean"):
    """x: (batch, number_nodes, input_shape) -> (batch, output_shape)."""
    B, N, F = x.shape
    S = N - 2
    H, OF = hidden, output_shape
    NF = N * F
    S2H = (S + 2) * H
    S2O = (S + 2) * OF
    NCY = S2O if operation == "mean" else 3 * OF

    # Free row-major reshape; the node gather/permutation is folded into slab A.
    x2d = x.reshape(B, NF).astype(jnp.float32)

    kernel = _make_user_block_kernel(N=N, F=F, H=H, OF=OF, S=S, operation=operation)

    flops = int(2 * B * (NF * S2H + S2H * S2O + NCY * H + NF * H + H * OF))
    transcendentals = int(B * (S2H + S2O + H + OF))
    bytes_accessed = int(4 * (x2d.size + slab_a.size + slab_b.size + B * OF))

    return pl.pallas_call(
        kernel,
        out_shape=jax.ShapeDtypeStruct((B, OF), jnp.float32),
        # Single program (no grid): the whole working set (~0.3 MiB) lives in
        # VMEM; only 3 input DMAs (x + 2 parameter slabs).
        in_specs=[pl.BlockSpec(memory_space=pltpu.MemorySpace.VMEM)] * 3,
        out_specs=pl.BlockSpec(memory_space=pltpu.MemorySpace.VMEM),
        cost_estimate=pl.CostEstimate(flops=flops,
                                      transcendentals=transcendentals,
                                      bytes_accessed=bytes_accessed),
    )(x2d, slab_a, slab_b)


# --------------------------- parameter creation ---------------------------- #
def init_net_params(key, in_f, out_f, hidden):
    k1, k2, k3, k4 = jax.random.split(key, 4)
    w1 = jax.random.normal(k1, (in_f, hidden), jnp.float32) / jnp.sqrt(jnp.float32(in_f))
    b1 = 0.1 * jax.random.normal(k2, (1, hidden), jnp.float32)
    g1 = jnp.ones((1, hidden), jnp.float32)
    be1 = jnp.zeros((1, hidden), jnp.float32)
    w2 = jax.random.normal(k3, (hidden, out_f), jnp.float32) / jnp.sqrt(jnp.float32(hidden))
    b2 = 0.1 * jax.random.normal(k4, (1, out_f), jnp.float32)
    g2 = jnp.ones((1, out_f), jnp.float32)
    be2 = jnp.zeros((1, out_f), jnp.float32)
    return (w1, b1, g1, be1, w2, b2, g2, be2)


# ------------------------------ pure-JAX ref ------------------------------- #
def _sigmoid_ref(x):
    return 1.0 / (1.0 + jnp.exp(-x))


def _bn_train_ref(h, gamma, beta):
    mean = jnp.mean(h, axis=0, keepdims=True)
    var = jnp.mean((h - mean) ** 2, axis=0, keepdims=True)
    return (h - mean) * lax.rsqrt(var + EPS) * gamma + beta


def _net_ref(x, params):
    # Keeps the Linear biases (the kernel drops them; training-mode BN cancels them).
    w1, b1, g1, be1, w2, b2, g2, be2 = params
    h = _sigmoid_ref(_bn_train_ref(x @ w1 + b1, g1, be1))
    y = h @ w2 + b2
    return _sigmoid_ref(_bn_train_ref(y, g2, be2))


def user_block_ref(x, all_params, order, operation="mean"):
    user_p, irs_p, bs_p, comb_p = all_params
    B, N, F = x.shape
    outs = []
    for ii in range(N - 2):
        src = ii if ii < order else ii + 1
        outs.append(_net_ref(x[:, src, :], user_p))
    output_user = jnp.stack(outs, axis=1)
    agg = jnp.mean(output_user, axis=1) if operation == "mean" else jnp.max(output_user, axis=1)
    cat = jnp.concatenate(
        [agg, _net_ref(x[:, -2, :], irs_p), _net_ref(x[:, -1, :], bs_p), x[:, order, :]], axis=1)
    return _net_ref(cat, comb_p)


# ---------------------------------- main ----------------------------------- #
if __name__ == "__main__":
    batch = 4
    number_nodes = 6
    input_shape = 16
    output_shape = 8
    hidden = 32
    order = 2
    operation = "mean"

    root = jax.random.PRNGKey(0)
    kx, ku, ki, kb, kc = jax.random.split(root, 5)

    x = jax.random.normal(kx, (batch, number_nodes, input_shape), jnp.float32)

    user_p = init_net_params(ku, input_shape, output_shape, hidden)
    irs_p = init_net_params(ki, input_shape, output_shape, hidden)
    bs_p = init_net_params(kb, input_shape, output_shape, hidden)
    comb_p = init_net_params(kc, output_shape * 3 + input_shape, output_shape, hidden)
    all_params = (user_p, irs_p, bs_p, comb_p)

    # One-time packing (parameters are static across forward calls).
    slab_a, slab_b = pack_user_block_params(all_params, number_nodes, order, operation)
    slab_a, slab_b = jax.block_until_ready((slab_a, slab_b))

    fwd = jax.jit(user_block_forward,
                  static_argnames=("hidden", "output_shape", "operation"))
    out = jax.block_until_ready(
        fwd(x, slab_a, slab_b, hidden=hidden, output_shape=output_shape,
            operation=operation))

    ref = user_block_ref(x, all_params, order, operation)
    assert out.shape == (batch, output_shape), out.shape
    np.testing.assert_allclose(np.asarray(out), np.asarray(ref), rtol=2e-2, atol=2e-2)

    print("KERNEL_OK")
</pallas_src>

<mosaic_0001>
module attributes {stable_mosaic.version = 11 : i64} {
  func.func @kernel(%arg0: memref<4x96xf32, #tpu.memory_space<vmem>>, %arg1: memref<104x192xf32, #tpu.memory_space<vmem>>, %arg2: memref<368x48xf32, #tpu.memory_space<vmem>>, %arg3: memref<4x8xf32, #tpu.memory_space<vmem>>) attributes {dimension_semantics = [], scalar_prefetch = 0 : i64, scratch_operands = 0 : i64, tpu.core_type = #tpu.core_type<tc>} {
    %c0 = arith.constant 0 : index
    %c0_0 = arith.constant 0 : index
    %0 = vector.load %arg0[%c0, %c0_0] : memref<4x96xf32, #tpu.memory_space<vmem>>, vector<4x96xf32>
    %c0_1 = arith.constant 0 : index
    %c0_2 = arith.constant 0 : index
    %1 = vector.load %arg1[%c0_1, %c0_2] : memref<104x192xf32, #tpu.memory_space<vmem>>, vector<96x192xf32>
    %c96 = arith.constant 96 : index
    %c0_3 = arith.constant 0 : index
    %2 = vector.load %arg1[%c96, %c0_3] : memref<104x192xf32, #tpu.memory_space<vmem>>, vector<1x192xf32>
    %c97 = arith.constant 97 : index
    %c0_4 = arith.constant 0 : index
    %3 = vector.load %arg1[%c97, %c0_4] : memref<104x192xf32, #tpu.memory_space<vmem>>, vector<1x192xf32>
    %c98 = arith.constant 98 : index
    %c0_5 = arith.constant 0 : index
    %4 = vector.load %arg1[%c98, %c0_5] : memref<104x192xf32, #tpu.memory_space<vmem>>, vector<1x48xf32>
    %c99 = arith.constant 99 : index
    %c0_6 = arith.constant 0 : index
    %5 = vector.load %arg1[%c99, %c0_6] : memref<104x192xf32, #tpu.memory_space<vmem>>, vector<1x48xf32>
    %c100 = arith.constant 100 : index
    %c0_7 = arith.constant 0 : index
    %6 = vector.load %arg1[%c100, %c0_7] : memref<104x192xf32, #tpu.memory_space<vmem>>, vector<1x32xf32>
    %c101 = arith.constant 101 : index
    %c0_8 = arith.constant 0 : index
    %7 = vector.load %arg1[%c101, %c0_8] : memref<104x192xf32, #tpu.memory_space<vmem>>, vector<1x32xf32>
    %c102 = arith.constant 102 : index
    %c0_9 = arith.constant 0 : index
    %8 = vector.load %arg1[%c102, %c0_9] : memref<104x192xf32, #tpu.memory_space<vmem>>, vector<1x8xf32>
    %c103 = arith.constant 103 : index
    %c0_10 = arith.constant 0 : index
    %9 = vector.load %arg1[%c103, %c0_10] : memref<104x192xf32, #tpu.memory_space<vmem>>, vector<1x8xf32>
    %c0_11 = arith.constant 0 : index
    %c0_12 = arith.constant 0 : index
    %10 = vector.load %arg2[%c0_11, %c0_12] : memref<368x48xf32, #tpu.memory_space<vmem>>, vector<192x48xf32>
    %c192 = arith.constant 192 : index
    %c0_13 = arith.constant 0 : index
    %11 = vector.load %arg2[%c192, %c0_13] : memref<368x48xf32, #tpu.memory_space<vmem>>, vector<48x32xf32>
    %c240 = arith.constant 240 : index
    %c0_14 = arith.constant 0 : index
    %12 = vector.load %arg2[%c240, %c0_14] : memref<368x48xf32, #tpu.memory_space<vmem>>, vector<96x32xf32>
    %c336 = arith.constant 336 : index
    %c0_15 = arith.constant 0 : index
    %13 = vector.load %arg2[%c336, %c0_15] : memref<368x48xf32, #tpu.memory_space<vmem>>, vector<32x8xf32>
    %cst = arith.constant dense<0.000000e+00> : vector<4x192xf32>
    %14 = tpu.matmul %0, %1, %cst {dimension_numbers = #tpu.dot_dimension_numbers<[1], [0], [0], [1], [0, 0, 1, 1], [], []>} : vector<4x96xf32>, vector<96x192xf32>, vector<4x192xf32> -> vector<4x192xf32>
    %cst_16 = arith.constant dense<0.000000e+00> : vector<192xf32>
    %15 = vector.multi_reduction <add>, %14, %cst_16 [0] : vector<4x192xf32> to vector<192xf32>
    %16 = vector.shape_cast %15 : vector<192xf32> to vector<1x192xf32>
    %cst_17 = arith.constant 4.000000e+00 : f32
    %17 = vector.broadcast %cst_17 : f32 to vector<1x192xf32>
    %18 = arith.divf %16, %17 : vector<1x192xf32>
    %19 = vector.broadcast %18 : vector<1x192xf32> to vector<4x192xf32>
    %20 = arith.subf %14, %19 : vector<4x192xf32>
    %21 = arith.mulf %20, %20 : vector<4x192xf32>
    %cst_18 = arith.constant dense<0.000000e+00> : vector<192xf32>
    %22 = vector.multi_reduction <add>, %21, %cst_18 [0] : vector<4x192xf32> to vector<192xf32>
    %23 = vector.shape_cast %22 : vector<192xf32> to vector<1x192xf32>
    %cst_19 = arith.constant 4.000000e+00 : f32
    %24 = vector.broadcast %cst_19 : f32 to vector<1x192xf32>
    %25 = arith.divf %23, %24 : vector<1x192xf32>
    %cst_20 = arith.constant 9.99999974E-6 : f32
    %26 = vector.broadcast %cst_20 : f32 to vector<1x192xf32>
    %27 = arith.addf %25, %26 : vector<1x192xf32>
    %28 = math.rsqrt %27 : vector<1x192xf32>
    %29 = vector.broadcast %28 : vector<1x192xf32> to vector<4x192xf32>
    %30 = arith.mulf %20, %29 : vector<4x192xf32>
    %31 = vector.broadcast %2 : vector<1x192xf32> to vector<4x192xf32>
    %32 = arith.mulf %30, %31 : vector<4x192xf32>
    %33 = vector.broadcast %3 : vector<1x192xf32> to vector<4x192xf32>
    %34 = arith.addf %32, %33 : vector<4x192xf32>
    %cst_21 = arith.constant 0.000000e+00 : f32
    %35 = vector.broadcast %cst_21 : f32 to vector<4x192xf32>
    %36 = arith.subf %35, %34 : vector<4x192xf32>
    %37 = math.exp %36 : vector<4x192xf32>
    %cst_22 = arith.constant 1.000000e+00 : f32
    %38 = vector.broadcast %cst_22 : f32 to vector<4x192xf32>
    %39 = arith.addf %38, %37 : vector<4x192xf32>
    %cst_23 = arith.constant 1.000000e+00 : f32
    %40 = vector.broadcast %cst_23 : f32 to vector<4x192xf32>
    %41 = arith.divf %40, %39 : vector<4x192xf32>
    %cst_24 = arith.constant dense<0.000000e+00> : vector<4x48xf32>
    %42 = tpu.matmul %41, %10, %cst_24 {dimension_numbers = #tpu.dot_dimension_numbers<[1], [0], [0], [1], [0, 0, 1, 1], [], []>} : vector<4x192xf32>, vector<192x48xf32>, vector<4x48xf32> -> vector<4x48xf32>
    %cst_25 = arith.constant dense<0.000000e+00> : vector<48xf32>
    %43 = vector.multi_reduction <add>, %42, %cst_25 [0] : vector<4x48xf32> to vector<48xf32>
    %44 = vector.shape_cast %43 : vector<48xf32> to vector<1x48xf32>
    %cst_26 = arith.constant 4.000000e+00 : f32
    %45 = vector.broadcast %cst_26 : f32 to vector<1x48xf32>
    %46 = arith.divf %44, %45 : vector<1x48xf32>
    %47 = vector.broadcast %46 : vector<1x48xf32> to vector<4x48xf32>
    %48 = arith.subf %42, %47 : vector<4x48xf32>
    %49 = arith.mulf %48, %48 : vector<4x48xf32>
    %cst_27 = arith.constant dense<0.000000e+00> : vector<48xf32>
    %50 = vector.multi_reduction <add>, %49, %cst_27 [0] : vector<4x48xf32> to vector<48xf32>
    %51 = vector.shape_cast %50 : vector<48xf32> to vector<1x48xf32>
    %cst_28 = arith.constant 4.000000e+00 : f32
    %52 = vector.broadcast %cst_28 : f32 to vector<1x48xf32>
    %53 = arith.divf %51, %52 : vector<1x48xf32>
    %cst_29 = arith.constant 9.99999974E-6 : f32
    %54 = vector.broadcast %cst_29 : f32 to vector<1x48xf32>
    %55 = arith.addf %53, %54 : vector<1x48xf32>
    %56 = math.rsqrt %55 : vector<1x48xf32>
    %57 = vector.broadcast %56 : vector<1x48xf32> to vector<4x48xf32>
    %58 = arith.mulf %48, %57 : vector<4x48xf32>
    %59 = vector.broadcast %4 : vector<1x48xf32> to vector<4x48xf32>
    %60 = arith.mulf %58, %59 : vector<4x48xf32>
    %61 = vector.broadcast %5 : vector<1x48xf32> to vector<4x48xf32>
    %62 = arith.addf %60, %61 : vector<4x48xf32>
    %cst_30 = arith.constant 0.000000e+00 : f32
    %63 = vector.broadcast %cst_30 : f32 to vector<4x48xf32>
    %64 = arith.subf %63, %62 : vector<4x48xf32>
    %65 = math.exp %64 : vector<4x48xf32>
    %cst_31 = arith.constant 1.000000e+00 : f32
    %66 = vector.broadcast %cst_31 : f32 to vector<4x48xf32>
    %67 = arith.addf %66, %65 : vector<4x48xf32>
    %cst_32 = arith.constant 1.000000e+00 : f32
    %68 = vector.broadcast %cst_32 : f32 to vector<4x48xf32>
    %69 = arith.divf %68, %67 : vector<4x48xf32>
    %cst_33 = arith.constant dense<0.000000e+00> : vector<4x32xf32>
    %70 = tpu.matmul %69, %11, %cst_33 {dimension_numbers = #tpu.dot_dimension_numbers<[1], [0], [0], [1], [0, 0, 1, 1], [], []>} : vector<4x48xf32>, vector<48x32xf32>, vector<4x32xf32> -> vector<4x32xf32>
    %cst_34 = arith.constant dense<0.000000e+00> : vector<4x32xf32>
    %71 = tpu.matmul %0, %12, %cst_34 {dimension_numbers = #tpu.dot_dimension_numbers<[1], [0], [0], [1], [0, 0, 1, 1], [], []>} : vector<4x96xf32>, vector<96x32xf32>, vector<4x32xf32> -> vector<4x32xf32>
    %72 = arith.addf %70, %71 : vector<4x32xf32>
    %cst_35 = arith.constant dense<0.000000e+00> : vector<32xf32>
    %73 = vector.multi_reduction <add>, %72, %cst_35 [0] : vector<4x32xf32> to vector<32xf32>
    %74 = vector.shape_cast %73 : vector<32xf32> to vector<1x32xf32>
    %cst_36 = arith.constant 4.000000e+00 : f32
    %75 = vector.broadcast %cst_36 : f32 to vector<1x32xf32>
    %76 = arith.divf %74, %75 : vector<1x32xf32>
    %77 = vector.broadcast %76 : vector<1x32xf32> to vector<4x32xf32>
    %78 = arith.subf %72, %77 : vector<4x32xf32>
    %79 = arith.mulf %78, %78 : vector<4x32xf32>
    %cst_37 = arith.constant dense<0.000000e+00> : vector<32xf32>
    %80 = vector.multi_reduction <add>, %79, %cst_37 [0] : vector<4x32xf32> to vector<32xf32>
    %81 = vector.shape_cast %80 : vector<32xf32> to vector<1x32xf32>
    %cst_38 = arith.constant 4.000000e+00 : f32
    %82 = vector.broadcast %cst_38 : f32 to vector<1x32xf32>
    %83 = arith.divf %81, %82 : vector<1x32xf32>
    %cst_39 = arith.constant 9.99999974E-6 : f32
    %84 = vector.broadcast %cst_39 : f32 to vector<1x32xf32>
    %85 = arith.addf %83, %84 : vector<1x32xf32>
    %86 = math.rsqrt %85 : vector<1x32xf32>
    %87 = vector.broadcast %86 : vector<1x32xf32> to vector<4x32xf32>
    %88 = arith.mulf %78, %87 : vector<4x32xf32>
    %89 = vector.broadcast %6 : vector<1x32xf32> to vector<4x32xf32>
    %90 = arith.mulf %88, %89 : vector<4x32xf32>
    %91 = vector.broadcast %7 : vector<1x32xf32> to vector<4x32xf32>
    %92 = arith.addf %90, %91 : vector<4x32xf32>
    %cst_40 = arith.constant 0.000000e+00 : f32
    %93 = vector.broadcast %cst_40 : f32 to vector<4x32xf32>
    %94 = arith.subf %93, %92 : vector<4x32xf32>
    %95 = math.exp %94 : vector<4x32xf32>
    %cst_41 = arith.constant 1.000000e+00 : f32
    %96 = vector.broadcast %cst_41 : f32 to vector<4x32xf32>
    %97 = arith.addf %96, %95 : vector<4x32xf32>
    %cst_42 = arith.constant 1.000000e+00 : f32
    %98 = vector.broadcast %cst_42 : f32 to vector<4x32xf32>
    %99 = arith.divf %98, %97 : vector<4x32xf32>
    %cst_43 = arith.constant dense<0.000000e+00> : vector<4x8xf32>
    %100 = tpu.matmul %99, %13, %cst_43 {dimension_numbers = #tpu.dot_dimension_numbers<[1], [0], [0], [1], [0, 0, 1, 1], [], []>} : vector<4x32xf32>, vector<32x8xf32>, vector<4x8xf32> -> vector<4x8xf32>
    %cst_44 = arith.constant dense<0.000000e+00> : vector<8xf32>
    %101 = vector.multi_reduction <add>, %100, %cst_44 [0] : vector<4x8xf32> to vector<8xf32>
    %102 = vector.shape_cast %101 : vector<8xf32> to vector<1x8xf32>
    %cst_45 = arith.constant 4.000000e+00 : f32
    %103 = vector.broadcast %cst_45 : f32 to vector<1x8xf32>
    %104 = arith.divf %102, %103 : vector<1x8xf32>
    %105 = vector.broadcast %104 : vector<1x8xf32> to vector<4x8xf32>
    %106 = arith.subf %100, %105 : vector<4x8xf32>
    %107 = arith.mulf %106, %106 : vector<4x8xf32>
    %cst_46 = arith.constant dense<0.000000e+00> : vector<8xf32>
    %108 = vector.multi_reduction <add>, %107, %cst_46 [0] : vector<4x8xf32> to vector<8xf32>
    %109 = vector.shape_cast %108 : vector<8xf32> to vector<1x8xf32>
    %cst_47 = arith.constant 4.000000e+00 : f32
    %110 = vector.broadcast %cst_47 : f32 to vector<1x8xf32>
    %111 = arith.divf %109, %110 : vector<1x8xf32>
    %cst_48 = arith.constant 9.99999974E-6 : f32
    %112 = vector.broadcast %cst_48 : f32 to vector<1x8xf32>
    %113 = arith.addf %111, %112 : vector<1x8xf32>
    %114 = math.rsqrt %113 : vector<1x8xf32>
    %115 = vector.broadcast %114 : vector<1x8xf32> to vector<4x8xf32>
    %116 = arith.mulf %106, %115 : vector<4x8xf32>
    %117 = vector.broadcast %8 : vector<1x8xf32> to vector<4x8xf32>
    %118 = arith.mulf %116, %117 : vector<4x8xf32>
    %119 = vector.broadcast %9 : vector<1x8xf32> to vector<4x8xf32>
    %120 = arith.addf %118, %119 : vector<4x8xf32>
    %cst_49 = arith.constant 0.000000e+00 : f32
    %121 = vector.broadcast %cst_49 : f32 to vector<4x8xf32>
    %122 = arith.subf %121, %120 : vector<4x8xf32>
    %123 = math.exp %122 : vector<4x8xf32>
    %cst_50 = arith.constant 1.000000e+00 : f32
    %124 = vector.broadcast %cst_50 : f32 to vector<4x8xf32>
    %125 = arith.addf %124, %123 : vector<4x8xf32>
    %cst_51 = arith.constant 1.000000e+00 : f32
    %126 = vector.broadcast %cst_51 : f32 to vector<4x8xf32>
    %127 = arith.divf %126, %125 : vector<4x8xf32>
    %c0_52 = arith.constant 0 : index
    %c0_53 = arith.constant 0 : index
    %128 = vector.load %arg3[%c0_52, %c0_53] : memref<4x8xf32, #tpu.memory_space<vmem>>, vector<4x8xf32>
    tpu.vector_store %arg3[%c0_52, %c0_53], %127 {strides = array<i32>} : memref<4x8xf32, #tpu.memory_space<vmem>>, vector<4x8xf32>,
    return
  }
}

</mosaic_0001>

<llo_original>
// kernel: user_block_forward.1
$region0: #{user_block_forward.1}
  #allocation0 [shape = 'u32[]', space=smem, size = 0x4, offset = 0x4, fixed_abs, tag = 'smem constant byte address 0x4 - core index']
  #allocation1 [shape = 'u32[72,128]{1,0:T(1,128)}', space=vmem, size = 0x9000, scoped, tag = 'internal scratch']
  %s0 = inlined_call_operand.vmem [shape: f32[4,96], index: 0, kind: input, shape index: {}]
  %s1 = inlined_call_operand.vmem [shape: f32[104,192], index: 1, kind: input, shape index: {}]
  %s2 = inlined_call_operand.vmem [shape: f32[368,48], index: 2, kind: input, shape index: {}]
  %s3 = inlined_call_operand.hbm [shape: f32[4,8], index: 3, kind: output, shape index: {}]
  %s4 = sld [smem:[#allocation0]]
  $region22: #{user_block_forward.1} parent=0
    _
  %s6 = ssub.s32 1, %s4
  %s7 = scalar_select 0, %s6, %s4
  $region1: #{user_block_forward.1} parent=0
    #allocation2 [shape = 'u8[2048]{0}', space=vmem, size = 0x800, scoped, tag = 'output window, operand 0, single buffered']
    #allocation3 [shape = 's32[1]{0}', space=sflag, size = 0x4, scoped, tag = 'scoped memory for user_block_forward.1']
    %8 = vsyncpa [#allocation3], 0
    // Predicated region
    $region2: #{user_block_forward.1} parent=1 // pred_check
      _
    $region3: #{user_block_forward.1} parent=1 // pred_check_branch
      %10 = sbr.rel (0) target = $region5
    $region4: #{user_block_forward.1} parent=1 // pred_region
      _
    $region5: #{user_block_forward.1} parent=1 // pred_fallthru
      _
    // Predicated region
    $region6: #{user_block_forward.1} parent=1 // pred_check
      _
    $region7: #{user_block_forward.1} parent=1 // pred_check_branch
      %12 = sbr.rel (0) target = $region9
    $region8: #{user_block_forward.1} parent=1 // pred_region
      _
    $region9: #{user_block_forward.1} parent=1 // pred_fallthru
      _
    // Predicated region
    $region10: #{user_block_forward.1} parent=1 // pred_check
      _
    $region11: #{user_block_forward.1} parent=1 // pred_check_branch
      %14 = sbr.rel (0) target = $region13
    $region12: #{user_block_forward.1} parent=1 // pred_region
      _
    $region13: #{user_block_forward.1} parent=1 // pred_fallthru
      _
    %v15 = vld [vmem:[%s0] sm:$0xf]
    %v16 = vld [vmem:[%s1] sm:$0xff]
    %v17 = vld [vmem:[%s1 + $0x8] sm:$0xff]
    %v18 = vld [vmem:[%s1 + $0x10] sm:$0xff]
    %v19 = vld [vmem:[%s1 + $0x18] sm:$0xff]
    %v20 = vld [vmem:[%s1 + $0x20] sm:$0xff]
    %v21 = vld [vmem:[%s1 + $0x28] sm:$0xff]
    %v22 = vld [vmem:[%s1 + $0x30] sm:$0xff]
    %v23 = vld [vmem:[%s1 + $0x38] sm:$0xff]
    %v24 = vld [vmem:[%s1 + $0x40] sm:$0xff]
    %v25 = vld [vmem:[%s1 + $0x48] sm:$0xff]
    %v26 = vld [vmem:[%s1 + $0x50] sm:$0xff]
    %v27 = vld [vmem:[%s1 + $0x58] sm:$0xff]
    %v28 = vld [vmem:[%s1 + $0x60] sm:$0xff]
    %v29 = vld [vmem:[%s1 + $0x68] sm:$0xff]
    %v30 = vld [vmem:[%s1 + $0x70] sm:$0xff]
    %v31 = vld [vmem:[%s1 + $0x78] sm:$0xff]
    %v32 = vld [vmem:[%s1 + $0x80] sm:$0xff]
    %v33 = vld [vmem:[%s1 + $0x88] sm:$0xff]
    %v34 = vld [vmem:[%s1 + $0x90] sm:$0xff]
    %v35 = vld [vmem:[%s1 + $0x98] sm:$0xff]
    %v36 = vld [vmem:[%s1 + $0xa0] sm:$0xff]
    %v37 = vld [vmem:[%s1 + $0xa8] sm:$0xff]
    %v38 = vld [vmem:[%s1 + $0xb0] sm:$0xff]
    %v39 = vld [vmem:[%s1 + $0xb8] sm:$0xff]
    %s40 = scalar_lea.vmem %s1, 192
    %v41 = vld [vmem:[%s40] ss:$8 sm:$0x3]
    %s42 = scalar_lea.vmem %s1, 193
    %v43 = vld [vmem:[%s42] ss:$8 sm:$0x3]
    %v44 = vld [vmem:[%s1 + $0xc2] ss:$0 sm:$0xff]
    %v45 = vld [vmem:[%s1 + $0xc3] ss:$0 sm:$0xff]
    %v46 = vld [vmem:[%s1 + $0xc4] ss:$0 sm:$0xff]
    %v47 = vld [vmem:[%s1 + $0xc5] ss:$0 sm:$0xff]
    %v48 = vld [vmem:[%s1 + $0xc6] ss:$0 sm:$0xff]
    %v49 = vld [vmem:[%s1 + $0xc7] ss:$0 sm:$0xff]
    %v50 = vld [vmem:[%s2] sm:$0xff]
    %v51 = vld [vmem:[%s2 + $0x8] sm:$0xff]
    %v52 = vld [vmem:[%s2 + $0x10] sm:$0xff]
    %v53 = vld [vmem:[%s2 + $0x18] sm:$0xff]
    %v54 = vld [vmem:[%s2 + $0x20] sm:$0xff]
    %v55 = vld [vmem:[%s2 + $0x28] sm:$0xff]
    %v56 = vld [vmem:[%s2 + $0x30] sm:$0xff]
    %v57 = vld [vmem:[%s2 + $0x38] sm:$0xff]
    %v58 = vld [vmem:[%s2 + $0x40] sm:$0xff]
    %v59 = vld [vmem:[%s2 + $0x48] sm:$0xff]
    %v60 = vld [vmem:[%s2 + $0x50] sm:$0xff]
    %v61 = vld [vmem:[%s2 + $0x58] sm:$0xff]
    %v62 = vld [vmem:[%s2 + $0x60] sm:$0xff]
    %v63 = vld [vmem:[%s2 + $0x68] sm:$0xff]
    %v64 = vld [vmem:[%s2 + $0x70] sm:$0xff]
    %v65 = vld [vmem:[%s2 + $0x78] sm:$0xff]
    %v66 = vld [vmem:[%s2 + $0x80] sm:$0xff]
    %v67 = vld [vmem:[%s2 + $0x88] sm:$0xff]
    %v68 = vld [vmem:[%s2 + $0x90] sm:$0xff]
    %v69 = vld [vmem:[%s2 + $0x98] sm:$0xff]
    %v70 = vld [vmem:[%s2 + $0xa0] sm:$0xff]
    %v71 = vld [vmem:[%s2 + $0xa8] sm:$0xff]
    %v72 = vld [vmem:[%s2 + $0xb0] sm:$0xff]
    %v73 = vld [vmem:[%s2 + $0xb8] sm:$0xff]
    %v74 = vld [vmem:[%s2 + $0xc0] sm:$0xff]
    %v75 = vld [vmem:[%s2 + $0xc8] sm:$0xff]
    %v76 = vld [vmem:[%s2 + $0xd0] sm:$0xff]
    %v77 = vld [vmem:[%s2 + $0xd8] sm:$0xff]
    %v78 = vld [vmem:[%s2 + $0xe0] sm:$0xff]
    %v79 = vld [vmem:[%s2 + $0xe8] sm:$0xff]
    %v80 = vld [vmem:[%s2 + $0xf0] sm:$0xff]
    %v81 = vld [vmem:[%s2 + $0xf8] sm:$0xff]
    %v82 = vld [vmem:[%s2 + $0x100] sm:$0xff]
    %v83 = vld [vmem:[%s2 + $0x108] sm:$0xff]
    %v84 = vld [vmem:[%s2 + $0x110] sm:$0xff]
    %v85 = vld [vmem:[%s2 + $0x118] sm:$0xff]
    %v86 = vld [vmem:[%s2 + $0x120] sm:$0xff]
    %v87 = vld [vmem:[%s2 + $0x128] sm:$0xff]
    %v88 = vld [vmem:[%s2 + $0x130] sm:$0xff]
    %v89 = vld [vmem:[%s2 + $0x138] sm:$0xff]
    %v90 = vld [vmem:[%s2 + $0x140] sm:$0xff]
    %v91 = vld [vmem:[%s2 + $0x148] sm:$0xff]
    %v92 = vld [vmem:[%s2 + $0x150] sm:$0xff]
    %v93 = vld [vmem:[%s2 + $0x158] sm:$0xff]
    %v94 = vld [vmem:[%s2 + $0x160] sm:$0xff]
    %v95 = vld [vmem:[%s2 + $0x168] sm:$0xff]
    %vm96 = vcmask 785408
    %v98 = vsel %vm96, %v15, 0
    %100 = vmatpush.msra.mxu0 0.0
    %101 = vmatpush.msra.mxu0 0.0
    %102 = vmatpush.msra.mxu0 0.0
    %103 = vmatpush.msra.mxu0 0.0
    %104 = vmatpush.msra.mxu0 %v38
    %105 = vmatpush.msra.mxu0 %v36
    %106 = vmatpush.msra.mxu0 %v34
    %107 = vmatpush.msra.mxu0 %v32
    %108 = vmatpush.msra.mxu0 %v30
    %109 = vmatpush.msra.mxu0 %v28
    %110 = vmatpush.msra.mxu0 %v26
    %111 = vmatpush.msra.mxu0 %v24
    %112 = vmatpush.msra.mxu0 %v22
    %113 = vmatpush.msra.mxu0 %v20
    %114 = vmatpush.msra.mxu0 %v18
    %115 = vmatpush.msra.mxu0 %v16
    %116 = vmatmul.f32.gmra.mxu0 %v98
    %v117 = vpop.f32.mrf.mxu0
    %v118 = vadd.f32 0.0, %v117
    %119 = vdwg.mxu0
    %120 = vmatpush.msra.mxu0 0.0
    %121 = vmatpush.msra.mxu0 0.0
    %122 = vmatpush.msra.mxu0 0.0
    %123 = vmatpush.msra.mxu0 0.0
    %124 = vmatpush.msra.mxu0 %v39
    %125 = vmatpush.msra.mxu0 %v37
    %126 = vmatpush.msra.mxu0 %v35
    %127 = vmatpush.msra.mxu0 %v33
    %128 = vmatpush.msra.mxu0 %v31
    %129 = vmatpush.msra.mxu0 %v29
    %130 = vmatpush.msra.mxu0 %v27
    %131 = vmatpush.msra.mxu0 %v25
    %132 = vmatpush.msra.mxu0 %v23
    %133 = vmatpush.msra.mxu0 %v21
    %134 = vmatpush.msra.mxu0 %v19
    %135 = vmatpush.msra.mxu0 %v17
    %136 = vmatmul.f32.gmra.mxu0 %v98
    %v137 = vpop.f32.mrf.mxu0
    %v138 = vadd.f32 0.0, %v137
    %139 = vdwg.mxu0
    %vm140 = vcmask 1043456
    %v141 = vsel %vm140, %v118, 0.0
    %v142 = vrot.slane %v141, 4
    %v143 = vadd.f32 %v141, %v142
    %v144 = vrot.slane %v143, 2
    %v145 = vadd.f32 %v143, %v144
    %v146 = vrot.slane %v145, 1
    %v147 = vadd.f32 %v145, %v146
    %vm148 = vcmask 519168
    %v149 = vsel %vm148, %v138, 0.0
    %v150 = vrot.slane %v149, 4
    %v151 = vadd.f32 %v149, %v150
    %v152 = vrot.slane %v151, 2
    %v153 = vadd.f32 %v151, %v152
    %v154 = vrot.slane %v153, 1
    %v155 = vadd.f32 %v153, %v154
    %v156 = vrcp.pop 4.0
    %v157 = vmul.f32 4.0, %v156
    %v158 = vsub.f32 1.0, %v157
    %v159 = vmul.f32 %v156, %v158
    %v160 = vadd.f32 %v156, %v159
    %vm161 = vweird.f32 %v156
    %v162 = vsel %vm161, %v156, %v160
    %v163 = vmul.f32 %v147, %v162
    %v164 = vmul.f32 %v155, %v162
    %v165 = vsub.f32 %v118, %v163
    %v166 = vsub.f32 %v138, %v164
    %v167 = vmul.f32 %v165, %v165
    %v168 = vmul.f32 %v166, %v166
    %v169 = vsel %vm140, %v167, 0.0
    %v170 = vrot.slane %v169, 4
    %v171 = vadd.f32 %v169, %v170
    %v172 = vrot.slane %v171, 2
    %v173 = vadd.f32 %v171, %v172
    %v174 = vrot.slane %v173, 1
    %v175 = vadd.f32 %v173, %v174
    %v176 = vsel %vm148, %v168, 0.0
    %v177 = vrot.slane %v176, 4
    %v178 = vadd.f32 %v176, %v177
    %v179 = vrot.slane %v178, 2
    %v180 = vadd.f32 %v178, %v179
    %v181 = vrot.slane %v180, 1
    %v182 = vadd.f32 %v180, %v181
    %v183 = vmul.f32 %v175, %v162
    %v184 = vmul.f32 %v182, %v162
    %v185 = vadd.f32 %v183, 1e-05
    %v186 = vadd.f32 %v184, 1e-05
    %v187 = vrsqrt.pop %v185
    %v188 = vmul.f32 %v187, %v185
    %v189 = vmul.f32 %v188, %v187
    %v190 = vmul.f32 0.5, %v189
    %v191 = vsub.f32 1.5, %v190
    %v192 = vmul.f32 %v187, %v191
    %vm193 = vweird.f32 %v185
    %vm194 = vweird.f32 %v187
    %vm195 = vmor %vm193, %vm194
    %v196 = vsel %vm195, %v187, %v192
    %v197 = vrsqrt.pop %v186
    %v198 = vmul.f32 %v197, %v186
    %v199 = vmul.f32 %v198, %v197
    %v200 = vmul.f32 0.5, %v199
    %v201 = vsub.f32 1.5, %v200
    %v202 = vmul.f32 %v197, %v201
    %vm203 = vweird.f32 %v186
    %vm204 = vweird.f32 %v197
    %vm205 = vmor %vm203, %vm204
    %v206 = vsel %vm205, %v197, %v202
    %v207 = vmul.f32 %v165, %v196
    %v208 = vmul.f32 %v166, %v206
    %v210 = vperm.slane %v41, 0
    %v211 = vperm.slane %v41, 1
    %v214 = vmul.f32 %v207, %v210
    %v215 = vmul.f32 %v208, %v211
    %v217 = vperm.slane %v43, 0
    %v218 = vperm.slane %v43, 1
    %v221 = vadd.f32 %v214, %v217
    %v222 = vadd.f32 %v215, %v218
    %v223 = vsub.f32 0.0, %v221
    %v224 = vsub.f32 0.0, %v222
    %v225 = vmul.f32 %v223, 1.442695
    %v226 = vpow.pop %v225
    %v227 = vmul.f32 %v224, 1.442695
    %v228 = vpow.pop %v227
    %v229 = vadd.f32 %v226, 1.0
    %v230 = vadd.f32 %v228, 1.0
    %v231 = vrcp.pop %v229
    %v232 = vmul.f32 %v229, %v231
    %v233 = vsub.f32 1.0, %v232
    %v234 = vmul.f32 %v231, %v233
    %v235 = vadd.f32 %v231, %v234
    %vm236 = vweird.f32 %v229
    %vm237 = vweird.f32 %v231
    %vm238 = vmor %vm236, %vm237
    %v239 = vsel %vm238, %v231, %v235
    %v240 = vand.u32 2147483647, %v229
    %vm241 = vcmp.eq.f32.partialorder %v240, 8.507059e+37
    %v242 = vand.u32 %v229, 2147483648
    %v243 = vor.u32 1.1754944e-38, %v242
    %v244 = vsel %vm241, %v243, %v239
    %v245 = vmul.f32 1.0, %v244
    %v246 = vrcp.pop %v230
    %v247 = vmul.f32 %v230, %v246
    %v248 = vsub.f32 1.0, %v247
    %v249 = vmul.f32 %v246, %v248
    %v250 = vadd.f32 %v246, %v249
    %vm251 = vweird.f32 %v230
    %vm252 = vweird.f32 %v246
    %vm253 = vmor %vm251, %vm252
    %v254 = vsel %vm253, %v246, %v250
    %v255 = vand.u32 2147483647, %v230
    %vm256 = vcmp.eq.f32.partialorder %v255, 8.507059e+37
    %v257 = vand.u32 %v230, 2147483648
    %v258 = vor.u32 1.1754944e-38, %v257
    %v259 = vsel %vm256, %v258, %v254
    %v260 = vmul.f32 1.0, %v259
    %vm261 = vcmask 523264
    %v263 = vsel %vm261, %v260, 0
    %265 = vmatpush.msra.mxu0 %v65
    %266 = vmatpush.msra.mxu0 %v64
    %267 = vmatpush.msra.mxu0 %v63
    %268 = vmatpush.msra.mxu0 %v62
    %269 = vmatpush.msra.mxu0 %v61
    %270 = vmatpush.msra.mxu0 %v60
    %271 = vmatpush.msra.mxu0 %v59
    %272 = vmatpush.msra.mxu0 %v58
    %273 = vmatpush.msra.mxu0 %v57
    %274 = vmatpush.msra.mxu0 %v56
    %275 = vmatpush.msra.mxu0 %v55
    %276 = vmatpush.msra.mxu0 %v54
    %277 = vmatpush.msra.mxu0 %v53
    %278 = vmatpush.msra.mxu0 %v52
    %279 = vmatpush.msra.mxu0 %v51
    %280 = vmatpush.msra.mxu0 %v50
    %281 = vmatmul.f32.gmra.mxu0 %v245
    %v282 = vpop.f32.mrf.mxu0
    %v283 = vadd.f32 0.0, %v282
    %284 = vdwg.mxu0
    %285 = vmatpush.msra.mxu0 0.0
    %286 = vmatpush.msra.mxu0 0.0
    %287 = vmatpush.msra.mxu0 0.0
    %288 = vmatpush.msra.mxu0 0.0
    %289 = vmatpush.msra.mxu0 0.0
    %290 = vmatpush.msra.mxu0 0.0
    %291 = vmatpush.msra.mxu0 0.0
    %292 = vmatpush.msra.mxu0 0.0
    %293 = vmatpush.msra.mxu0 %v73
    %294 = vmatpush.msra.mxu0 %v72
    %295 = vmatpush.msra.mxu0 %v71
    %296 = vmatpush.msra.mxu0 %v70
    %297 = vmatpush.msra.mxu0 %v69
    %298 = vmatpush.msra.mxu0 %v68
    %299 = vmatpush.msra.mxu0 %v67
    %300 = vmatpush.msra.mxu0 %v66
    %301 = vmatmul.f32.gmra.mxu0 %v263
    %v302 = vpop.f32.mrf.mxu0
    %v303 = vadd.f32 %v283, %v302
    %304 = vdwg.mxu0
    %vm305 = vcmask 388096
    %v306 = vsel %vm305, %v303, 0.0
    %v307 = vrot.slane %v306, 4
    %v308 = vadd.f32 %v306, %v307
    %v309 = vrot.slane %v308, 2
    %v310 = vadd.f32 %v308, %v309
    %v311 = vrot.slane %v310, 1
    %v312 = vadd.f32 %v310, %v311
    %v313 = vmul.f32 %v312, %v162
    %v314 = vsub.f32 %v303, %v313
    %v315 = vmul.f32 %v314, %v314
    %v316 = vsel %vm305, %v315, 0.0
    %v317 = vrot.slane %v316, 4
    %v318 = vadd.f32 %v316, %v317
    %v319 = vrot.slane %v318, 2
    %v320 = vadd.f32 %v318, %v319
    %v321 = vrot.slane %v320, 1
    %v322 = vadd.f32 %v320, %v321
    %v323 = vmul.f32 %v322, %v162
    %v324 = vadd.f32 %v323, 1e-05
    %v325 = vrsqrt.pop %v324
    %v326 = vmul.f32 %v325, %v324
    %v327 = vmul.f32 %v326, %v325
    %v328 = vmul.f32 0.5, %v327
    %v329 = vsub.f32 1.5, %v328
    %v330 = vmul.f32 %v325, %v329
    %vm331 = vweird.f32 %v324
    %vm332 = vweird.f32 %v325
    %vm333 = vmor %vm331, %vm332
    %v334 = vsel %vm333, %v325, %v330
    %v335 = vmul.f32 %v314, %v334
    %v336 = vmul.f32 %v335, %v44
    %v337 = vadd.f32 %v336, %v45
    %v338 = vsub.f32 0.0, %v337
    %v339 = vmul.f32 %v338, 1.442695
    %v340 = vpow.pop %v339
    %v341 = vadd.f32 %v340, 1.0
    %v342 = vrcp.pop %v341
    %v343 = vmul.f32 %v341, %v342
    %v344 = vsub.f32 1.0, %v343
    %v345 = vmul.f32 %v342, %v344
    %v346 = vadd.f32 %v342, %v345
    %vm347 = vweird.f32 %v341
    %vm348 = vweird.f32 %v342
    %vm349 = vmor %vm347, %vm348
    %v350 = vsel %vm349, %v342, %v346
    %v351 = vand.u32 2147483647, %v341
    %vm352 = vcmp.eq.f32.partialorder %v351, 8.507059e+37
    %v353 = vand.u32 %v341, 2147483648
    %v354 = vor.u32 1.1754944e-38, %v353
    %v355 = vsel %vm352, %v354, %v350
    %v356 = vmul.f32 1.0, %v355
    %357 = vmatpush.msra.mxu0 0.0
    %358 = vmatpush.msra.mxu0 0.0
    %359 = vmatpush.msra.mxu0 0.0
    %360 = vmatpush.msra.mxu0 0.0
    %361 = vmatpush.msra.mxu0 %v91
    %362 = vmatpush.msra.mxu0 %v90
    %363 = vmatpush.msra.mxu0 %v89
    %364 = vmatpush.msra.mxu0 %v88
    %365 = vmatpush.msra.mxu0 %v87
    %366 = vmatpush.msra.mxu0 %v86
    %367 = vmatpush.msra.mxu0 %v85
    %368 = vmatpush.msra.mxu0 %v84
    %369 = vmatpush.msra.mxu0 %v83
    %370 = vmatpush.msra.mxu0 %v82
    %371 = vmatpush.msra.mxu0 %v81
    %372 = vmatpush.msra.mxu0 %v80
    %373 = vmatmul.f32.gmra.mxu0 %v98
    %v374 = vpop.f32.mrf.mxu0
    %v375 = vadd.f32 0.0, %v374
    %376 = vdwg.mxu0
    %vm377 = vcmask 392192
    %v379 = vsel %vm377, %v356, 0
    %381 = vmatpush.msra.mxu0 0.0
    %382 = vmatpush.msra.mxu0 0.0
    %383 = vmatpush.msra.mxu0 0.0
    %384 = vmatpush.msra.mxu0 0.0
    %385 = vmatpush.msra.mxu0 0.0
    %386 = vmatpush.msra.mxu0 0.0
    %387 = vmatpush.msra.mxu0 0.0
    %388 = vmatpush.msra.mxu0 0.0
    %389 = vmatpush.msra.mxu0 0.0
    %390 = vmatpush.msra.mxu0 0.0
    %391 = vmatpush.msra.mxu0 %v79
    %392 = vmatpush.msra.mxu0 %v78
    %393 = vmatpush.msra.mxu0 %v77
    %394 = vmatpush.msra.mxu0 %v76
    %395 = vmatpush.msra.mxu0 %v75
    %396 = vmatpush.msra.mxu0 %v74
    %397 = vmatmul.f32.gmra.mxu0 %v379
    %v398 = vpop.f32.mrf.mxu0
    %v399 = vadd.f32 %v375, %v398
    %400 = vdwg.mxu0
    %vm401 = vcmask 257024
    %v402 = vsel %vm401, %v399, 0.0
    %v403 = vrot.slane %v402, 4
    %v404 = vadd.f32 %v402, %v403
    %v405 = vrot.slane %v404, 2
    %v406 = vadd.f32 %v404, %v405
    %v407 = vrot.slane %v406, 1
    %v408 = vadd.f32 %v406, %v407
    %v409 = vmul.f32 %v408, %v162
    %v410 = vsub.f32 %v399, %v409
    %v411 = vmul.f32 %v410, %v410
    %v412 = vsel %vm401, %v411, 0.0
    %v413 = vrot.slane %v412, 4
    %v414 = vadd.f32 %v412, %v413
    %v415 = vrot.slane %v414, 2
    %v416 = vadd.f32 %v414, %v415
    %v417 = vrot.slane %v416, 1
    %v418 = vadd.f32 %v416, %v417
    %v419 = vmul.f32 %v418, %v162
    %v420 = vadd.f32 %v419, 1e-05
    %v421 = vrsqrt.pop %v420
    %v422 = vmul.f32 %v421, %v420
    %v423 = vmul.f32 %v422, %v421
    %v424 = vmul.f32 0.5, %v423
    %v425 = vsub.f32 1.5, %v424
    %v426 = vmul.f32 %v421, %v425
    %vm427 = vweird.f32 %v420
    %vm428 = vweird.f32 %v421
    %vm429 = vmor %vm427, %vm428
    %v430 = vsel %vm429, %v421, %v426
    %v431 = vmul.f32 %v410, %v430
    %v432 = vmul.f32 %v431, %v46
    %v433 = vadd.f32 %v432, %v47
    %v434 = vsub.f32 0.0, %v433
    %v435 = vmul.f32 %v434, 1.442695
    %v436 = vpow.pop %v435
    %v437 = vadd.f32 %v436, 1.0
    %v438 = vrcp.pop %v437
    %v439 = vmul.f32 %v437, %v438
    %v440 = vsub.f32 1.0, %v439
    %v441 = vmul.f32 %v438, %v440
    %v442 = vadd.f32 %v438, %v441
    %vm443 = vweird.f32 %v437
    %vm444 = vweird.f32 %v438
    %vm445 = vmor %vm443, %vm444
    %v446 = vsel %vm445, %v438, %v442
    %v447 = vand.u32 2147483647, %v437
    %vm448 = vcmp.eq.f32.partialorder %v447, 8.507059e+37
    %v449 = vand.u32 %v437, 2147483648
    %v450 = vor.u32 1.1754944e-38, %v449
    %v451 = vsel %vm448, %v450, %v446
    %v452 = vmul.f32 1.0, %v451
    %vm453 = vcmask 261120
    %v455 = vsel %vm453, %v452, 0
    %457 = vmatpush.msra.mxu0 0.0
    %458 = vmatpush.msra.mxu0 0.0
    %459 = vmatpush.msra.mxu0 0.0
    %460 = vmatpush.msra.mxu0 0.0
    %461 = vmatpush.msra.mxu0 0.0
    %462 = vmatpush.msra.mxu0 0.0
    %463 = vmatpush.msra.mxu0 0.0
    %464 = vmatpush.msra.mxu0 0.0
    %465 = vmatpush.msra.mxu0 0.0
    %466 = vmatpush.msra.mxu0 0.0
    %467 = vmatpush.msra.mxu0 0.0
    %468 = vmatpush.msra.mxu0 0.0
    %469 = vmatpush.msra.mxu0 %v95
    %470 = vmatpush.msra.mxu0 %v94
    %471 = vmatpush.msra.mxu0 %v93
    %472 = vmatpush.msra.mxu0 %v92
    %473 = vmatmul.f32.gmra.mxu0 %v455
    %v474 = vpop.f32.mrf.mxu0
    %v475 = vadd.f32 0.0, %v474
    %476 = vdwg.mxu0
    %vm477 = vcmask 60416
    %v478 = vsel %vm477, %v475, 0.0
    %v479 = vrot.slane %v478, 4
    %v480 = vadd.f32 %v478, %v479
    %v481 = vrot.slane %v480, 2
    %v482 = vadd.f32 %v480, %v481
    %v483 = vrot.slane %v482, 1
    %v484 = vadd.f32 %v482, %v483
    %v485 = vmul.f32 %v484, %v162
    %v486 = vsub.f32 %v475, %v485
    %v487 = vmul.f32 %v486, %v486
    %v488 = vsel %vm477, %v487, 0.0
    %v489 = vrot.slane %v488, 4
    %v490 = vadd.f32 %v488, %v489
    %v491 = vrot.slane %v490, 2
    %v492 = vadd.f32 %v490, %v491
    %v493 = vrot.slane %v492, 1
    %v494 = vadd.f32 %v492, %v493
    %v495 = vmul.f32 %v494, %v162
    %v496 = vadd.f32 %v495, 1e-05
    %v497 = vrsqrt.pop %v496
    %v498 = vmul.f32 %v497, %v496
    %v499 = vmul.f32 %v498, %v497
    %v500 = vmul.f32 0.5, %v499
    %v501 = vsub.f32 1.5, %v500
    %v502 = vmul.f32 %v497, %v501
    %vm503 = vweird.f32 %v496
    %vm504 = vweird.f32 %v497
    %vm505 = vmor %vm503, %vm504
    %v506 = vsel %vm505, %v497, %v502
    %v507 = vmul.f32 %v486, %v506
    %v508 = vmul.f32 %v507, %v48
    %v509 = vadd.f32 %v508, %v49
    %v510 = vsub.f32 0.0, %v509
    %v511 = vmul.f32 %v510, 1.442695
    %v512 = vpow.pop %v511
    %v513 = vadd.f32 %v512, 1.0
    %v514 = vrcp.pop %v513
    %v515 = vmul.f32 %v513, %v514
    %v516 = vsub.f32 1.0, %v515
    %v517 = vmul.f32 %v514, %v516
    %v518 = vadd.f32 %v514, %v517
    %vm519 = vweird.f32 %v513
    %vm520 = vweird.f32 %v514
    %vm521 = vmor %vm519, %vm520
    %v522 = vsel %vm521, %v514, %v518
    %v523 = vand.u32 2147483647, %v513
    %vm524 = vcmp.eq.f32.partialorder %v523, 8.507059e+37
    %v525 = vand.u32 %v513, 2147483648
    %v526 = vor.u32 1.1754944e-38, %v525
    %v527 = vsel %vm524, %v526, %v522
    %v528 = vmul.f32 1.0, %v527
    %529 = vst.msk [vmem:[#allocation2] sm:$0xf] %vm477, %v528
    // Predicated region
    $region14: #{user_block_forward.1} parent=1 // pred_check
      _
    $region15: #{user_block_forward.1} parent=1 // pred_check_branch
      %531 = sbr.rel (0) target = $region17
    $region16: #{user_block_forward.1} parent=1 // pred_region
      %533 = vsyncadd [#allocation3], 0
      %s535 = sshll.u32 [#allocation2], 4
      %s536 = int_to_ptr.vmem [resolvable:$true] %s535
      %s537 = sshll.u32 %s3, 4
      %s538 = int_to_ptr.hbm [resolvable:$true] %s537
      %540 = dma.vmem_to_hbm [thread:$0]  %s536, 64, %s538, [#allocation3]
    $region17: #{user_block_forward.1} parent=1 // pred_fallthru
      _
    // Predicated region
    $region18: #{user_block_forward.1} parent=1 // pred_check
      _
    $region19: #{user_block_forward.1} parent=1 // pred_check_branch
      %542 = sbr.rel (0) target = $region21
    $region20: #{user_block_forward.1} parent=1 // pred_region
      %544 = dma.done [#allocation3], 64
    $region21: #{user_block_forward.1} parent=1 // pred_fallthru
      _
    %545 = vsyncpa [#allocation3], 1

</llo_original>
